<compile_context>
chip_gen: v7x
topology: tpu7x:2x2x1
jax: 0.10.0
libtpu: 0.0.40
codegen_flags: <defaults>
</compile_context>

<pallas_src>
import jax
import jax.numpy as jnp
from jax.experimental import pallas as pl
from jax.experimental.pallas import tpu as pltpu


def _logreg_kernel(x_ref, w_ref, b_ref, o_ref):
    # x_ref: [TILE_N, F] VMEM tile of samples
    # w_ref: [8, F]      VMEM, 8 identical copies of the weight row (resident)
    # b_ref: [1, 1]      SMEM scalar bias
    # o_ref: [1, TILE_N] VMEM, lane-dense output row
    logits = jax.lax.dot_general(
        w_ref[...],
        x_ref[...],
        dimension_numbers=(((1,), (1,)), ((), ())),  # W @ x_tile^T
        preferred_element_type=jnp.float32,
    )  # -> [8, TILE_N], all rows identical
    z = logits[0:1, :] + b_ref[0, 0]
    o_ref[...] = jax.nn.sigmoid(z).astype(o_ref.dtype)


def _round_up(v, m):
    return ((v + m - 1) // m) * m


def _choose_tile_n(n_rows, n_feat, itemsize):
    # VMEM footprint of one (TILE_N, F) block: the lane (last) dim is padded
    # to a multiple of 128, so small-F inputs are amplified in VMEM relative
    # to their HBM bytes.  Budget ~4 MiB per padded block so the
    # double-buffered input + resident weight + output fit comfortably inside
    # the v5e 16 MiB scoped-VMEM default.
    lane_padded = _round_up(max(n_feat, 1), 128)
    budget = 4 * 1024 * 1024
    tile = 8192
    while tile > 128 and tile * lane_padded * itemsize > budget:
        tile //= 2
    # Don't over-allocate for tiny N; keep a multiple of 128 for lane density.
    return min(tile, _round_up(max(n_rows, 1), 128))


def monatone_logreg_forward(x, weight, bias):
    """sigmoid(x @ weight^T + bias)

    Args:
      x:      [N, F] float32/bfloat16
      weight: [1, F] (nn.Linear(F, 1).weight layout)
      bias:   [1]    (nn.Linear(F, 1).bias)
    Returns:
      [N, 1] float32
    """
    N, F = x.shape
    itemsize = jnp.dtype(x.dtype).itemsize
    tile_n = _choose_tile_n(N, F, itemsize)
    num_tiles = pl.cdiv(N, tile_n)

    # Replicate the weight row to 8 sublanes -> clean (8, F) MXU LHS tile.
    # Match x's dtype so the MXU sees homogeneous operands (f32 accumulate).
    w8 = jnp.broadcast_to(weight.reshape(1, F).astype(x.dtype), (8, F))
    b = bias.reshape(1, 1).astype(jnp.float32)

    cost = pl.CostEstimate(
        flops=2 * N * F,
        transcendentals=N,                       # sigmoid -> exp on the EUP
        bytes_accessed=N * F * itemsize + N * 4 + 8 * F * itemsize,
    )

    out = pl.pallas_call(
        _logreg_kernel,
        out_shape=jax.ShapeDtypeStruct((num_tiles, tile_n), jnp.float32),
        grid=(num_tiles,),
        in_specs=[
            pl.BlockSpec((tile_n, F), lambda i: (i, 0)),        # x tile (pipelined)
            pl.BlockSpec((8, F), lambda i: (0, 0)),             # weight, resident
            pl.BlockSpec(memory_space=pltpu.MemorySpace.SMEM),  # bias scalar
        ],
        out_specs=pl.BlockSpec((1, tile_n), lambda i: (i, 0)),  # lane-dense
        compiler_params=pltpu.CompilerParams(
            dimension_semantics=("parallel",),
        ),
        cost_estimate=cost,
    )(x, w8, b)

    # (num_tiles, tile_n) lane-dense slab -> [N, 1]; rows past N (padding of
    # the last partial tile) are dropped here.
    return out.reshape(num_tiles * tile_n)[:N].reshape(N, 1)


if __name__ == "__main__":
    key = jax.random.PRNGKey(0)
    kx, kw, kb, kx2 = jax.random.split(key, 4)

    # Small shapes consistent with the module: 16 samples x 8 feature columns.
    N, F = 16, 8
    x = jax.random.normal(kx, (N, F), dtype=jnp.float32)
    weight = 0.1 * jax.random.normal(kw, (1, F), dtype=jnp.float32)
    bias = 0.1 * jax.random.normal(kb, (1,), dtype=jnp.float32)

    out = monatone_logreg_forward(x, weight, bias)
    out = jax.block_until_ready(out)

    ref = jax.nn.sigmoid(x @ weight.T + bias)
    assert out.shape == (N, 1)
    assert jnp.allclose(out, ref, atol=1e-3, rtol=1e-3), float(
        jnp.max(jnp.abs(out - ref))
    )

    # Second check: larger N with a partial last tile (exercises the
    # pipelined / parallel path and the padded-row slicing).
    N2 = 5000
    x2 = jax.random.normal(kx2, (N2, F), dtype=jnp.float32)
    out2 = jax.block_until_ready(monatone_logreg_forward(x2, weight, bias))
    ref2 = jax.nn.sigmoid(x2 @ weight.T + bias)
    assert out2.shape == (N2, 1)
    assert jnp.allclose(out2, ref2, atol=1e-3, rtol=1e-3), float(
        jnp.max(jnp.abs(out2 - ref2))
    )

    print("KERNEL_OK")
</pallas_src>

<mosaic_0001>
module attributes {stable_mosaic.version = 11 : i64} {
  func.func @_logreg_kernel(%arg0: i32, %arg1: memref<128x8xf32, #tpu.memory_space<vmem>>, %arg2: memref<8x8xf32, #tpu.memory_space<vmem>>, %arg3: memref<1x1xf32, #tpu.memory_space<smem>>, %arg4: memref<1x128xf32, #tpu.memory_space<vmem>>) attributes {dimension_semantics = [#tpu.dimension_semantics<parallel>], iteration_bounds = array<i64: 1>, scalar_prefetch = 0 : i64, scratch_operands = 0 : i64, tpu.core_type = #tpu.core_type<tc>, window_params = [{transform_indices = @transform_0, window_bounds = array<i64: 128, 8>}, {pipeline_mode = #tpu.pipeline_mode<synchronous>, transform_indices = @transform_1, window_bounds = array<i64: 8, 8>}, {transform_indices = @transform_2, window_bounds = array<i64: 1, 1>}, {transform_indices = @transform_3, window_bounds = array<i64: 1, 128>}]} {
    %c0 = arith.constant 0 : index
    %c0_0 = arith.constant 0 : index
    %0 = vector.load %arg2[%c0, %c0_0] : memref<8x8xf32, #tpu.memory_space<vmem>>, vector<8x8xf32>
    %c0_1 = arith.constant 0 : index
    %c0_2 = arith.constant 0 : index
    %1 = vector.load %arg1[%c0_1, %c0_2] : memref<128x8xf32, #tpu.memory_space<vmem>>, vector<128x8xf32>
    %cst = arith.constant dense<0.000000e+00> : vector<8x128xf32>
    %2 = tpu.matmul %0, %1, %cst {dimension_numbers = #tpu.dot_dimension_numbers<[1], [1], [0], [0], [0, 0, 1, 0], [], []>} : vector<8x8xf32>, vector<128x8xf32>, vector<8x128xf32> -> vector<8x128xf32>
    %3 = vector.extract_strided_slice %2 {offsets = [0, 0], sizes = [1, 128], strides = [1, 1]} : vector<8x128xf32> to vector<1x128xf32>
    %c0_3 = arith.constant 0 : index
    %c0_4 = arith.constant 0 : index
    %4 = memref.load %arg3[%c0_3, %c0_4] : memref<1x1xf32, #tpu.memory_space<smem>>
    %5 = vector.broadcast %4 : f32 to vector<1x128xf32>
    %6 = arith.addf %3, %5 : vector<1x128xf32>
    %7 = arith.negf %6 : vector<1x128xf32>
    %8 = math.exp %7 : vector<1x128xf32>
    %cst_5 = arith.constant 1.000000e+00 : f32
    %9 = vector.broadcast %cst_5 : f32 to vector<1x128xf32>
    %10 = arith.addf %9, %8 : vector<1x128xf32>
    %11 = arith.divf %9, %10 : vector<1x128xf32>
    %c0_6 = arith.constant 0 : index
    %c0_7 = arith.constant 0 : index
    %12 = vector.load %arg4[%c0_6, %c0_7] : memref<1x128xf32, #tpu.memory_space<vmem>>, vector<1x128xf32>
    tpu.vector_store %arg4[%c0_6, %c0_7], %11 {strides = array<i32>} : memref<1x128xf32, #tpu.memory_space<vmem>>, vector<1x128xf32>,
    return
  }
  func.func @transform_0(%arg0: i32) -> (i32, i32) {
    %c0_i32 = arith.constant 0 : i32
    %c0_i32_0 = arith.constant 0 : i32
    return %arg0, %c0_i32 : i32, i32
  }
  func.func @transform_1(%arg0: i32) -> (i32, i32) {
    %c0_i32 = arith.constant 0 : i32
    %c0_i32_0 = arith.constant 0 : i32
    %c0_i32_1 = arith.constant 0 : i32
    return %c0_i32, %c0_i32_0 : i32, i32
  }
  func.func @transform_2(%arg0: i32) -> (i32, i32) {
    %c0_i32 = arith.constant 0 : i32
    %c0_i32_0 = arith.constant 0 : i32
    %c0_i32_1 = arith.constant 0 : i32
    return %c0_i32, %c0_i32_0 : i32, i32
  }
  func.func @transform_3(%arg0: i32) -> (i32, i32) {
    %c0_i32 = arith.constant 0 : i32
    %c0_i32_0 = arith.constant 0 : i32
    return %arg0, %c0_i32 : i32, i32
  }
}

</mosaic_0001>

<llo_original>
// kernel: tpu_custom_call.1
$region0: #{tpu_custom_call.1}
  #allocation0 [shape = 'u32[]', space=smem, size = 0x4, offset = 0x4, fixed_abs, tag = 'smem constant byte address 0x4 - core index']
  #allocation1 [shape = 'u32[144,128]{1,0:T(1,128)}', space=vmem, size = 0x12000, scoped, tag = 'internal scratch']
  #allocation2 [shape = 'f32[1,1]{1,0:T(1,128)S(6)}', space=smem, size = 0x200, scoped, tag = 'scoped memory for tpu_custom_call.1']
  %s0 = inlined_call_operand.vmem [shape: f32[16,8], index: 0, kind: input, shape index: {}]
  %s1 = inlined_call_operand.vmem [shape: f32[8,8], index: 1, kind: input, shape index: {}]
  %s2 = inlined_call_operand.<no memory space> [shape: f32[1,1], index: 2, kind: input, shape index: {}]
  %s3 = inlined_call_operand.hbm [shape: f32[1,128], index: 3, kind: output, shape index: {}]
  %s4 = sld [smem:[#allocation0]]
  $region22: #{tpu_custom_call.1} parent=0
    _
  %s6 = ssub.s32 1, %s4
  %s7 = scalar_select 0, %s6, %s4
  %8 = sst [smem:[#allocation2]] %s2
  $region1: #{tpu_custom_call.1} parent=0
    #allocation3 [shape = 'u8[512]{0}', space=vmem, size = 0x400, scoped, tag = 'output window, operand 0, single buffered']
    #allocation4 [shape = 's32[1]{0}', space=sflag, size = 0x4, scoped, tag = 'scoped memory for tpu_custom_call.1']
    %9 = vsyncpa [#allocation4], 0
    // Predicated region
    $region2: #{tpu_custom_call.1} parent=1 // pred_check
      _
    $region3: #{tpu_custom_call.1} parent=1 // pred_check_branch
      %11 = sbr.rel (0) target = $region5
    $region4: #{tpu_custom_call.1} parent=1 // pred_region
      _
    $region5: #{tpu_custom_call.1} parent=1 // pred_fallthru
      _
    // Predicated region
    $region6: #{tpu_custom_call.1} parent=1 // pred_check
      _
    $region7: #{tpu_custom_call.1} parent=1 // pred_check_branch
      %13 = sbr.rel (0) target = $region9
    $region8: #{tpu_custom_call.1} parent=1 // pred_region
      _
    $region9: #{tpu_custom_call.1} parent=1 // pred_fallthru
      _
    // Predicated region
    $region10: #{tpu_custom_call.1} parent=1 // pred_check
      _
    $region11: #{tpu_custom_call.1} parent=1 // pred_check_branch
      %15 = sbr.rel (0) target = $region13
    $region12: #{tpu_custom_call.1} parent=1 // pred_region
      _
    $region13: #{tpu_custom_call.1} parent=1 // pred_fallthru
      _
    %v16 = vld [vmem:[%s1] sm:$0xff]
    %v17 = vld [vmem:[%s0] sm:$0xff]
    %v18 = vld [vmem:[%s0 + $0x8] sm:$0xff]
    %v19 = vld [vmem:[%s0 + $0x10] sm:$0xff]
    %v20 = vld [vmem:[%s0 + $0x18] sm:$0xff]
    %v21 = vld [vmem:[%s0 + $0x20] sm:$0xff]
    %v22 = vld [vmem:[%s0 + $0x28] sm:$0xff]
    %v23 = vld [vmem:[%s0 + $0x30] sm:$0xff]
    %v24 = vld [vmem:[%s0 + $0x38] sm:$0xff]
    %v25 = vld [vmem:[%s0 + $0x40] sm:$0xff]
    %v26 = vld [vmem:[%s0 + $0x48] sm:$0xff]
    %v27 = vld [vmem:[%s0 + $0x50] sm:$0xff]
    %v28 = vld [vmem:[%s0 + $0x58] sm:$0xff]
    %v29 = vld [vmem:[%s0 + $0x60] sm:$0xff]
    %v30 = vld [vmem:[%s0 + $0x68] sm:$0xff]
    %v31 = vld [vmem:[%s0 + $0x70] sm:$0xff]
    %v32 = vld [vmem:[%s0 + $0x78] sm:$0xff]
    %vm33 = vcmask 64512
    %v35 = vsel %vm33, %v16, 0
    %v38 = vsel %vm33, %v17, 0
    %v41 = vsel %vm33, %v18, 0
    %v44 = vsel %vm33, %v19, 0
    %v47 = vsel %vm33, %v20, 0
    %v50 = vsel %vm33, %v21, 0
    %v53 = vsel %vm33, %v22, 0
    %v56 = vsel %vm33, %v23, 0
    %v59 = vsel %vm33, %v24, 0
    %v62 = vsel %vm33, %v25, 0
    %v65 = vsel %vm33, %v26, 0
    %v68 = vsel %vm33, %v27, 0
    %v71 = vsel %vm33, %v28, 0
    %v74 = vsel %vm33, %v29, 0
    %v77 = vsel %vm33, %v30, 0
    %v80 = vsel %vm33, %v31, 0
    %v83 = vsel %vm33, %v32, 0
    %85 = vmatprep.subr.mxu0 0.0
    %86 = vmatpush1.xpose.msra.mxu0 %v38
    %87 = vmatprep.subr.mxu0 0.0
    %88 = vmatpush1.xpose.msra.mxu0 %v41
    %89 = vmatprep.subr.mxu0 0.0
    %90 = vmatpush1.xpose.msra.mxu0 %v44
    %91 = vmatprep.subr.mxu0 0.0
    %92 = vmatpush1.xpose.msra.mxu0 %v47
    %93 = vmatprep.subr.mxu0 0.0
    %94 = vmatpush1.xpose.msra.mxu0 %v50
    %95 = vmatprep.subr.mxu0 0.0
    %96 = vmatpush1.xpose.msra.mxu0 %v53
    %97 = vmatprep.subr.mxu0 0.0
    %98 = vmatpush1.xpose.msra.mxu0 %v56
    %99 = vmatprep.subr.mxu0 0.0
    %100 = vmatpush1.xpose.msra.mxu0 %v59
    %101 = vmatprep.subr.mxu0 0.0
    %102 = vmatpush1.xpose.msra.mxu0 %v62
    %103 = vmatprep.subr.mxu0 0.0
    %104 = vmatpush1.xpose.msra.mxu0 %v65
    %105 = vmatprep.subr.mxu0 0.0
    %106 = vmatpush1.xpose.msra.mxu0 %v68
    %107 = vmatprep.subr.mxu0 0.0
    %108 = vmatpush1.xpose.msra.mxu0 %v71
    %109 = vmatprep.subr.mxu0 0.0
    %110 = vmatpush1.xpose.msra.mxu0 %v74
    %111 = vmatprep.subr.mxu0 0.0
    %112 = vmatpush1.xpose.msra.mxu0 %v77
    %113 = vmatprep.subr.mxu0 0.0
    %114 = vmatpush1.xpose.msra.mxu0 %v80
    %115 = vmatprep.subr.mxu0 0.0
    %116 = vmatpush1.xpose.msra.mxu0 %v83
    %117 = vmatprep.subr.mxu0 0.0
    %118 = vmatpush1.xpose.msra.mxu0 0.0
    %119 = vmatprep.subr.mxu0 0.0
    %120 = vmatpush1.xpose.msra.mxu0 0.0
    %121 = vmatprep.subr.mxu0 0.0
    %122 = vmatpush1.xpose.msra.mxu0 0.0
    %123 = vmatprep.subr.mxu0 0.0
    %124 = vmatpush1.xpose.msra.mxu0 0.0
    %125 = vmatprep.subr.mxu0 0.0
    %126 = vmatpush1.xpose.msra.mxu0 0.0
    %127 = vmatprep.subr.mxu0 0.0
    %128 = vmatpush1.xpose.msra.mxu0 0.0
    %129 = vmatprep.subr.mxu0 0.0
    %130 = vmatpush1.xpose.msra.mxu0 0.0
    %131 = vmatprep.subr.mxu0 0.0
    %132 = vmatpush1.xpose.msra.mxu0 0.0
    %133 = vmatprep.subr.mxu0 0.0
    %134 = vmatpush1.xpose.msra.mxu0 0.0
    %135 = vmatprep.subr.mxu0 0.0
    %136 = vmatpush1.xpose.msra.mxu0 0.0
    %137 = vmatprep.subr.mxu0 0.0
    %138 = vmatpush1.xpose.msra.mxu0 0.0
    %139 = vmatprep.subr.mxu0 0.0
    %140 = vmatpush1.xpose.msra.mxu0 0.0
    %141 = vmatprep.subr.mxu0 0.0
    %142 = vmatpush1.xpose.msra.mxu0 0.0
    %143 = vmatprep.subr.mxu0 0.0
    %144 = vmatpush1.xpose.msra.mxu0 0.0
    %145 = vmatprep.subr.mxu0 0.0
    %146 = vmatpush1.xpose.msra.mxu0 0.0
    %147 = vmatprep.subr.mxu0 0.0
    %148 = vmatpush1.xpose.msra.mxu0 0.0
    %149 = vmatprep.mubr.f32.mxu0 0.0
    %150 = vmatmul.mubr.f32.gmra.mrb[0].mxu0 %v35
    %v151 = vpop.f32.mrb[0].mxu0
    %v152 = vadd.f32 0.0, %v151
    %v153 = vpop.f32.mrb[0].mxu0
    %154 = vdwg.mxu0
    %s155 = sld [smem:[#allocation2]]
    %v156 = vstv %s155
    %v157 = vadd.f32 %v152, %v156
    %v158 = vxor.u32 %v157, 2147483648
    %v159 = vmul.f32 %v158, 1.442695
    %v160 = vpow.pop %v159
    %v161 = vadd.f32 %v160, 1.0
    %v162 = vrcp.pop %v161
    %v163 = vmul.f32 1.0, %v162
    %164 = vst [vmem:[#allocation3] sm:$0x1] %v163
    // Predicated region
    $region14: #{tpu_custom_call.1} parent=1 // pred_check
      _
    $region15: #{tpu_custom_call.1} parent=1 // pred_check_branch
      %166 = sbr.rel (0) target = $region17
    $region16: #{tpu_custom_call.1} parent=1 // pred_region
      %s168 = ssub.s32 16, 16
      %169 = vsyncadd [#allocation4], %s168
      %s171 = sshll.u32 [#allocation3], 4
      %s172 = int_to_ptr.vmem [resolvable:$true] %s171
      %174 = dma.vmem_to_hbm [thread:$0]  %s172, 16, %s3, [#allocation4]
    $region17: #{tpu_custom_call.1} parent=1 // pred_fallthru
      _
    // Predicated region
    $region18: #{tpu_custom_call.1} parent=1 // pred_check
      _
    $region19: #{tpu_custom_call.1} parent=1 // pred_check_branch
      %176 = sbr.rel (0) target = $region21
    $region20: #{tpu_custom_call.1} parent=1 // pred_region
      %177 = dma.done [#allocation4], 16
    $region21: #{tpu_custom_call.1} parent=1 // pred_fallthru
      _
    %178 = vsyncpa [#allocation4], 1

</llo_original>
